<compile_context>
chip_gen: v7x
topology: tpu7x:2x2x1
jax: 0.10.0
libtpu: 0.0.40
codegen_flags: <defaults>
</compile_context>

<pallas_src>
import functools

import jax
import jax.numpy as jnp
from jax import lax
from jax.experimental import pallas as pl
from jax.experimental.pallas import tpu as pltpu


def _round_up(x, m):
    return ((x + m - 1) // m) * m


def _vmem_capacity_bytes():
    try:
        info = pltpu.get_tpu_info()
        cap = getattr(info, "vmem_capacity_bytes", None)
        if cap:
            return int(cap)
    except Exception:
        pass
    return 128 * 1024 * 1024  # assume 128 MiB parts if the query is unavailable


def _ce_row_tile(n_rows, n_cls, itemsize, tile_vmem_budget, target_block_bytes=2 << 20):
    # Dtype-aware sublane multiple (8 rows f32, 16 bf16, 32 int8/fp8).
    sub = max(8, (4 // max(itemsize, 1)) * 8)
    # Rows so the HBM logits block is ~target_block_bytes per grid step.
    tn_hbm = max(sub, (target_block_bytes // max(n_cls * itemsize, 1)) // sub * sub)
    # Rows so double-buffered logits + the f32 cast temp + targets fit VMEM budget.
    per_row_vmem = n_cls * (2 * itemsize + 4) + 8
    tn_vmem = max(sub, (tile_vmem_budget // per_row_vmem) // sub * sub)
    tn = min(tn_hbm, tn_vmem, _round_up(n_rows, sub))
    # Megacore (v7x): make sure there are >=2 grid steps when the problem allows.
    while _round_up(n_rows, tn) // tn < 2 and tn >= 2 * sub:
        tn = max(sub, _round_up(tn // 2, sub))
    return tn


# ----------------------------- Fused kernel -----------------------------
def ce_reg_kernel(x_ref, t_ref, tr_ref, ce_ref, reg_ref, *, n_valid):
    # x_ref:  [TN, C] logits tile          t_ref: [TN, 1] int32 targets tile
    # tr_ref: [B, d, K] full trans tensor (resident; constant block index)
    # ce_ref: [1, 128] per-tile CE partial sum (lane-broadcast)
    # reg_ref:[1, 128] mean orthogonality residual norm (lane-broadcast)
    tn, n_cls = x_ref.shape
    i = pl.program_id(0)

    # ---------------- cross-entropy partial sum over this row tile ----------------
    x = x_ref[...].astype(jnp.float32)                                   # [TN, C]
    t = t_ref[...]                                                       # [TN, 1]
    m = jnp.max(x, axis=-1, keepdims=True)                               # [TN, 1]
    lse = jnp.log(jnp.sum(jnp.exp(x - m), axis=-1, keepdims=True)) + m   # [TN, 1]
    col = lax.broadcasted_iota(jnp.int32, (1, n_cls), 1)                 # [1, C]
    picked = jnp.sum(jnp.where(col == t, x, 0.0), axis=-1, keepdims=True)  # [TN,1]
    loss = lse - picked                                                  # [TN, 1]
    # Mask padded rows inside the kernel (global row index vs. N).
    row = i * tn + lax.broadcasted_iota(jnp.int32, (tn, 1), 0)
    loss = jnp.where(row < n_valid, loss, 0.0)
    partial = jnp.sum(loss, axis=0, keepdims=True)                       # [1, 1]
    ce_ref[...] = jnp.broadcast_to(partial, ce_ref.shape)

    # ---------------- orthogonality regularizer (tiny; hidden under DMA) ----------------
    a = tr_ref[...].astype(jnp.float32)                                  # [B, d, K]
    b, d, _ = a.shape
    gram = jnp.einsum("bik,bjk->bij", a, a,
                      preferred_element_type=jnp.float32)                # [B, d, d]
    r = lax.broadcasted_iota(jnp.int32, (1, d, d), 1)
    c = lax.broadcasted_iota(jnp.int32, (1, d, d), 2)
    resid = gram - (r == c).astype(jnp.float32)                          # A A^T - I
    fro2 = jnp.sum(jnp.sum(resid * resid, axis=2), axis=1, keepdims=True)  # [B, 1]
    reg = jnp.sum(jnp.sqrt(fro2), axis=0, keepdims=True) / jnp.float32(b)  # [1, 1]
    reg_ref[...] = jnp.broadcast_to(reg, reg_ref.shape)


# ----------------------------- Module equivalent -----------------------------
def ce_with_reg(logits, target, trans, reg_weight=1.0):
    n_rows, n_cls = logits.shape
    b, d, k = trans.shape
    itemsize = jnp.dtype(logits.dtype).itemsize
    tr_itemsize = jnp.dtype(trans.dtype).itemsize

    # Generation-aware VMEM budgets (v7x has only 64 MiB VMEM per TensorCore).
    vmem_cap = _vmem_capacity_bytes()
    scoped_cap = min(vmem_cap // 2, 48 << 20)    # 32 MiB on v7x, 48 MiB on 128 MiB parts
    tile_budget = min(vmem_cap // 8, 16 << 20)   # 8 MiB on v7x, 16 MiB otherwise

    tn = _ce_row_tile(n_rows, n_cls, itemsize, tile_budget)
    n_pad = _round_up(n_rows, tn)
    n_tiles = n_pad // tn

    if n_pad != n_rows:
        logits = jnp.pad(logits, ((0, n_pad - n_rows), (0, 0)))
        target = jnp.pad(target, ((0, n_pad - n_rows),))
    t2d = target.astype(jnp.int32).reshape(n_pad, 1)

    # Scoped-VMEM limit from the actual buffers (double-buffered logits, the f32
    # cast temp, targets, resident trans, f32 Gram/residual temps, outputs) plus
    # headroom for Mosaic internal scratch.
    needed = (2 * tn * n_cls * itemsize
              + tn * n_cls * 4
              + 2 * tn * 4
              + 2 * b * d * k * tr_itemsize
              + 4 * b * d * d * 4
              + 4 * 128 * 4
              + (2 << 20))
    vmem_limit = int(min(max(needed, 8 << 20), scoped_cap))

    ce_part, reg_out = pl.pallas_call(
        functools.partial(ce_reg_kernel, n_valid=n_rows),
        out_shape=(
            jax.ShapeDtypeStruct((n_tiles, 128), jnp.float32),
            jax.ShapeDtypeStruct((n_tiles, 128), jnp.float32),
        ),
        grid=(n_tiles,),
        in_specs=[
            pl.BlockSpec((tn, n_cls), lambda i: (i, 0)),
            pl.BlockSpec((tn, 1), lambda i: (i, 0)),
            pl.BlockSpec((b, d, k), lambda i: (0, 0, 0)),   # resident across the grid
        ],
        out_specs=[
            pl.BlockSpec((1, 128), lambda i: (i, 0)),
            pl.BlockSpec((1, 128), lambda i: (i, 0)),
        ],
        compiler_params=pltpu.CompilerParams(
            dimension_semantics=("parallel",),
            vmem_limit_bytes=vmem_limit,
        ),
        cost_estimate=pl.CostEstimate(
            flops=5 * n_pad * n_cls + n_tiles * (2 * b * d * d * k + 4 * b * d * d),
            transcendentals=n_pad * (n_cls + 1) + n_tiles * b,
            bytes_accessed=(n_pad * n_cls * itemsize + n_pad * 4
                            + b * d * k * tr_itemsize + 2 * n_tiles * 128 * 4),
        ),
    )(logits, t2d, trans)

    ce = jnp.sum(ce_part[:, 0]) / jnp.float32(n_rows)
    reg = reg_out[0, 0]
    return ce + reg_weight * reg


# ----------------------------- Reference (pure JAX) -----------------------------
def _ref(logits, target, trans, reg_weight=1.0):
    lse = jax.scipy.special.logsumexp(logits, axis=-1)
    picked = jnp.take_along_axis(logits, target[:, None], axis=-1)[:, 0]
    l1 = jnp.mean(lse - picked)
    d = trans.shape[1]
    g = jnp.einsum("bij,bkj->bik", trans, trans) - jnp.eye(d)[None]
    l2 = jnp.mean(jnp.sqrt(jnp.sum(g * g, axis=(1, 2))))
    return l1 + reg_weight * l2


if __name__ == "__main__":
    key = jax.random.PRNGKey(0)
    k1, k2, k3 = jax.random.split(key, 3)

    N, C = 8, 32          # CE: batch of 8, 32 classes
    B, d, K = 2, 8, 8     # trans: batch of 2, 8x8 feature transforms

    logits = jax.random.normal(k1, (N, C), dtype=jnp.float32)
    target = jax.random.randint(k2, (N,), 0, C, dtype=jnp.int32)
    trans = jax.random.normal(k3, (B, d, K), dtype=jnp.float32)

    out = ce_with_reg(logits, target, trans, reg_weight=1.0)
    out = jax.block_until_ready(out)

    ref = _ref(logits, target, trans, reg_weight=1.0)
    assert jnp.allclose(out, ref, rtol=1e-5, atol=1e-5), (out, ref)

    print("KERNEL_OK")
</pallas_src>

<mosaic_0001>
module attributes {stable_mosaic.version = 11 : i64} {
  func.func @ce_reg_kernel(%arg0: i32, %arg1: memref<8x32xf32, #tpu.memory_space<vmem>>, %arg2: memref<8x1xi32, #tpu.memory_space<vmem>>, %arg3: memref<2x8x8xf32, #tpu.memory_space<vmem>>, %arg4: memref<1x128xf32, #tpu.memory_space<vmem>>, %arg5: memref<1x128xf32, #tpu.memory_space<vmem>>) attributes {dimension_semantics = [#tpu.dimension_semantics<parallel>], iteration_bounds = array<i64: 1>, scalar_prefetch = 0 : i64, scratch_operands = 0 : i64, tpu.core_type = #tpu.core_type<tc>, window_params = [{transform_indices = @transform_0, window_bounds = array<i64: 8, 32>}, {transform_indices = @transform_1, window_bounds = array<i64: 8, 1>}, {pipeline_mode = #tpu.pipeline_mode<synchronous>, transform_indices = @transform_2, window_bounds = array<i64: 2, 8, 8>}, {transform_indices = @transform_3, window_bounds = array<i64: 1, 128>}, {transform_indices = @transform_4, window_bounds = array<i64: 1, 128>}]} {
    %c0 = arith.constant 0 : index
    %c0_0 = arith.constant 0 : index
    %0 = vector.load %arg1[%c0, %c0_0] : memref<8x32xf32, #tpu.memory_space<vmem>>, vector<8x32xf32>
    %c0_1 = arith.constant 0 : index
    %c0_2 = arith.constant 0 : index
    %1 = vector.load %arg2[%c0_1, %c0_2] : memref<8x1xi32, #tpu.memory_space<vmem>>, vector<8x1xi32>
    %cst = arith.constant dense<0xFF800000> : vector<8xf32>
    %2 = vector.multi_reduction <maximumf>, %0, %cst [1] : vector<8x32xf32> to vector<8xf32>
    %3 = vector.shape_cast %2 : vector<8xf32> to vector<8x1xf32>
    %4 = vector.broadcast %3 : vector<8x1xf32> to vector<8x32xf32>
    %5 = arith.subf %0, %4 : vector<8x32xf32>
    %6 = math.exp %5 : vector<8x32xf32>
    %cst_3 = arith.constant dense<0.000000e+00> : vector<8xf32>
    %7 = vector.multi_reduction <add>, %6, %cst_3 [1] : vector<8x32xf32> to vector<8xf32>
    %8 = vector.shape_cast %7 : vector<8xf32> to vector<8x1xf32>
    %9 = math.log %8 : vector<8x1xf32>
    %10 = arith.addf %9, %3 : vector<8x1xf32>
    %11 = tpu.iota {dimensions = array<i32: 1>} : vector<1x32xi32>
    %12 = vector.broadcast %11 : vector<1x32xi32> to vector<8x32xi32>
    %13 = vector.broadcast %1 : vector<8x1xi32> to vector<8x32xi32>
    %14 = arith.cmpi eq, %12, %13 : vector<8x32xi32>
    %cst_4 = arith.constant 0.000000e+00 : f32
    %15 = vector.broadcast %cst_4 : f32 to vector<8x32xf32>
    %16 = arith.select %14, %0, %15 : vector<8x32xi1>, vector<8x32xf32>
    %cst_5 = arith.constant dense<0.000000e+00> : vector<8xf32>
    %17 = vector.multi_reduction <add>, %16, %cst_5 [1] : vector<8x32xf32> to vector<8xf32>
    %18 = vector.shape_cast %17 : vector<8xf32> to vector<8x1xf32>
    %19 = arith.subf %10, %18 : vector<8x1xf32>
    %c8_i32 = arith.constant 8 : i32
    %20 = arith.muli %arg0, %c8_i32 : i32
    %21 = tpu.iota {dimensions = array<i32: 0>} : vector<8x1xi32>
    %22 = vector.broadcast %20 : i32 to vector<8x1xi32>
    %23 = arith.addi %22, %21 : vector<8x1xi32>
    %c8_i32_6 = arith.constant 8 : i32
    %24 = vector.broadcast %c8_i32_6 : i32 to vector<8x1xi32>
    %25 = arith.cmpi slt, %23, %24 : vector<8x1xi32>
    %cst_7 = arith.constant 0.000000e+00 : f32
    %26 = vector.broadcast %cst_7 : f32 to vector<8x1xf32>
    %27 = arith.select %25, %19, %26 : vector<8x1xi1>, vector<8x1xf32>
    %cst_8 = arith.constant dense<0.000000e+00> : vector<1xf32>
    %28 = vector.multi_reduction <add>, %27, %cst_8 [0] : vector<8x1xf32> to vector<1xf32>
    %29 = vector.shape_cast %28 : vector<1xf32> to vector<1x1xf32>
    %30 = vector.shape_cast %29 : vector<1x1xf32> to vector<1x1xf32>
    %31 = vector.broadcast %30 : vector<1x1xf32> to vector<1x128xf32>
    %c0_9 = arith.constant 0 : index
    %c0_10 = arith.constant 0 : index
    %32 = vector.load %arg4[%c0_9, %c0_10] : memref<1x128xf32, #tpu.memory_space<vmem>>, vector<1x128xf32>
    tpu.vector_store %arg4[%c0_9, %c0_10], %31 {strides = array<i32>} : memref<1x128xf32, #tpu.memory_space<vmem>>, vector<1x128xf32>,
    %c0_11 = arith.constant 0 : index
    %c0_12 = arith.constant 0 : index
    %c0_13 = arith.constant 0 : index
    %33 = vector.load %arg3[%c0_11, %c0_12, %c0_13] : memref<2x8x8xf32, #tpu.memory_space<vmem>>, vector<2x8x8xf32>
    "tpu.trace_start"() <{level = 10 : i32, message = "bik,bjk->bij"}> : () -> ()
    %cst_14 = arith.constant dense<0.000000e+00> : vector<2x8x8xf32>
    %34 = tpu.matmul %33, %33, %cst_14 {dimension_numbers = #tpu.dot_dimension_numbers<[2], [2], [1], [1], [0, 0, 0, 1, 1, 1], [0], [0]>} : vector<2x8x8xf32>, vector<2x8x8xf32>, vector<2x8x8xf32> -> vector<2x8x8xf32>
    "tpu.trace_stop"() : () -> ()
    %35 = tpu.iota {dimensions = array<i32: 1>} : vector<1x8x8xi32>
    %36 = tpu.iota {dimensions = array<i32: 2>} : vector<1x8x8xi32>
    %37 = arith.cmpi eq, %35, %36 : vector<1x8x8xi32>
    %38 = arith.extui %37 : vector<1x8x8xi1> to vector<1x8x8xi32>
    %39 = arith.sitofp %38 : vector<1x8x8xi32> to vector<1x8x8xf32>
    %40 = vector.broadcast %39 : vector<1x8x8xf32> to vector<2x8x8xf32>
    %41 = arith.subf %34, %40 : vector<2x8x8xf32>
    %42 = arith.mulf %41, %41 : vector<2x8x8xf32>
    %cst_15 = arith.constant dense<0.000000e+00> : vector<2x8xf32>
    %43 = vector.multi_reduction <add>, %42, %cst_15 [2] : vector<2x8x8xf32> to vector<2x8xf32>
    %cst_16 = arith.constant dense<0.000000e+00> : vector<2xf32>
    %44 = vector.multi_reduction <add>, %43, %cst_16 [1] : vector<2x8xf32> to vector<2xf32>
    %45 = vector.shape_cast %44 : vector<2xf32> to vector<2x1xf32>
    %46 = math.sqrt %45 : vector<2x1xf32>
    %cst_17 = arith.constant dense<0.000000e+00> : vector<1xf32>
    %47 = vector.multi_reduction <add>, %46, %cst_17 [0] : vector<2x1xf32> to vector<1xf32>
    %48 = vector.shape_cast %47 : vector<1xf32> to vector<1x1xf32>
    %cst_18 = arith.constant 2.000000e+00 : f32
    %49 = vector.broadcast %cst_18 : f32 to vector<1x1xf32>
    %50 = arith.divf %48, %49 : vector<1x1xf32>
    %51 = vector.shape_cast %50 : vector<1x1xf32> to vector<1x1xf32>
    %52 = vector.broadcast %51 : vector<1x1xf32> to vector<1x128xf32>
    %c0_19 = arith.constant 0 : index
    %c0_20 = arith.constant 0 : index
    %53 = vector.load %arg5[%c0_19, %c0_20] : memref<1x128xf32, #tpu.memory_space<vmem>>, vector<1x128xf32>
    tpu.vector_store %arg5[%c0_19, %c0_20], %52 {strides = array<i32>} : memref<1x128xf32, #tpu.memory_space<vmem>>, vector<1x128xf32>,
    return
  }
  func.func @transform_0(%arg0: i32) -> (i32, i32) {
    %c0_i32 = arith.constant 0 : i32
    %c0_i32_0 = arith.constant 0 : i32
    return %arg0, %c0_i32 : i32, i32
  }
  func.func @transform_1(%arg0: i32) -> (i32, i32) {
    %c0_i32 = arith.constant 0 : i32
    %c0_i32_0 = arith.constant 0 : i32
    return %arg0, %c0_i32 : i32, i32
  }
  func.func @transform_2(%arg0: i32) -> (i32, i32, i32) {
    %c0_i32 = arith.constant 0 : i32
    %c0_i32_0 = arith.constant 0 : i32
    %c0_i32_1 = arith.constant 0 : i32
    %c0_i32_2 = arith.constant 0 : i32
    return %c0_i32, %c0_i32_0, %c0_i32_1 : i32, i32, i32
  }
  func.func @transform_3(%arg0: i32) -> (i32, i32) {
    %c0_i32 = arith.constant 0 : i32
    %c0_i32_0 = arith.constant 0 : i32
    return %arg0, %c0_i32 : i32, i32
  }
  func.func @transform_4(%arg0: i32) -> (i32, i32) {
    %c0_i32 = arith.constant 0 : i32
    %c0_i32_0 = arith.constant 0 : i32
    return %arg0, %c0_i32 : i32, i32
  }
}

</mosaic_0001>

<llo_original>
// kernel: tpu_custom_call.1
$region0: #{tpu_custom_call.1}
  #allocation0 [shape = 'u32[]', space=smem, size = 0x4, offset = 0x4, fixed_abs, tag = 'smem constant byte address 0x4 - core index']
  #allocation1 [shape = 'u32[144,128]{1,0:T(1,128)}', space=vmem, size = 0x12000, scoped, tag = 'internal scratch']
  %s0 = inlined_call_operand.hbm [shape: f32[8,32], index: 0, kind: input, shape index: {}]
  %s1 = inlined_call_operand.vmem [shape: s32[8,1], index: 1, kind: input, shape index: {}]
  %s2 = inlined_call_operand.vmem [shape: f32[2,8,8], index: 2, kind: input, shape index: {}]
  %s3 = inlined_call_operand.hbm [shape: f32[1,128], index: 3, kind: output, shape index: {0}]
  %s4 = inlined_call_operand.hbm [shape: f32[1,128], index: 4, kind: output, shape index: {1}]
  %5 = xla_tuple %s3, %s4
  %s6 = sld [smem:[#allocation0]]
  $region34: #{tpu_custom_call.1} parent=0
    _
  %s8 = ssub.s32 1, %s6
  %s9 = scalar_select 0, %s8, %s6
  $region1: #{tpu_custom_call.1} parent=0
    #allocation2 [shape = 'u8[4096]{0}', space=vmem, size = 0x1000, scoped, tag = 'input window, operand 0, single buffered']
    #allocation3 [shape = 's32[1]{0}', space=sflag, size = 0x4, scoped, tag = 'scoped memory for tpu_custom_call.1']
    #allocation4 [shape = 's32[1]{0}', space=sflag, size = 0x4, scoped, tag = 'scoped memory for tpu_custom_call.1']
    #allocation5 [shape = 'u8[512]{0}', space=vmem, size = 0x400, scoped, tag = 'output window, operand 0, single buffered']
    #allocation6 [shape = 'u8[512]{0}', space=vmem, size = 0x400, scoped, tag = 'output window, operand 1, single buffered']
    #allocation7 [shape = 's32[1]{0}', space=sflag, size = 0x4, scoped, tag = 'scoped memory for tpu_custom_call.1']
    %10 = vsyncpa [#allocation3], 0
    %11 = vsyncpa [#allocation4], 0
    %12 = vsyncpa [#allocation7], 0
    // Predicated region
    $region2: #{tpu_custom_call.1} parent=1 // pred_check
      _
    $region3: #{tpu_custom_call.1} parent=1 // pred_check_branch
      %14 = sbr.rel (0) target = $region5
    $region4: #{tpu_custom_call.1} parent=1 // pred_region
      %s16 = ssub.s32 128, 128
      %17 = vsyncadd [#allocation3], %s16
      %s19 = sshll.u32 [#allocation2], 4
      %s20 = int_to_ptr.vmem [resolvable:$true] %s19
      %22 = dma.hbm_to_vmem [thread:$0]  %s0, 128, %s20, [#allocation3]
    $region5: #{tpu_custom_call.1} parent=1 // pred_fallthru
      _
    // Predicated region
    $region6: #{tpu_custom_call.1} parent=1 // pred_check
      _
    $region7: #{tpu_custom_call.1} parent=1 // pred_check_branch
      %24 = sbr.rel (0) target = $region9
    $region8: #{tpu_custom_call.1} parent=1 // pred_region
      _
    $region9: #{tpu_custom_call.1} parent=1 // pred_fallthru
      _
    // Predicated region
    $region10: #{tpu_custom_call.1} parent=1 // pred_check
      _
    $region11: #{tpu_custom_call.1} parent=1 // pred_check_branch
      %26 = sbr.rel (0) target = $region13
    $region12: #{tpu_custom_call.1} parent=1 // pred_region
      _
    $region13: #{tpu_custom_call.1} parent=1 // pred_fallthru
      _
    // Predicated region
    $region14: #{tpu_custom_call.1} parent=1 // pred_check
      _
    $region15: #{tpu_custom_call.1} parent=1 // pred_check_branch
      %28 = sbr.rel (0) target = $region17
    $region16: #{tpu_custom_call.1} parent=1 // pred_region
      %29 = dma.done [#allocation3], 128
    $region17: #{tpu_custom_call.1} parent=1 // pred_fallthru
      _
    %v30 = vld [vmem:[#allocation2] sm:$0xff]
    %v31 = vld [vmem:[%s1] sm:$0xff]
    %vm32 = vcmask 261120
    %v33 = vsel %vm32, %v30, -inf
    %34 = vmax.xlane.f32.xlu0 %v33
    %v35 = vpop.xlane.xlu0 %34
    %v36 = vsub.f32 %v30, %v35
    %v37 = vmul.f32 %v36, 1.442695
    %v38 = vpow.pop %v37
    %v39 = vsel %vm32, %v38, 0.0
    %40 = vadd.xlane.f32.xlu0 %v39
    %v41 = vpop.xlane.xlu0 %40
    %v42 = vlog2.pop %v41
    %v43 = vmul.f32 %v42, 0.6931472
    %v44 = vadd.f32 %v43, %v35
    %v45 = vlaneseq
    %v46 = vand.u32 %v45, 127
    %47 = vset.pattern.permute.xlu0 0
    %48 = vperm.xlu0 %47, %v31
    %v49 = vpop.permute.xlu0 %48
    %vm50 = vcmp.eq.s32.totalorder %v46, %v49
    %v51 = vsel %vm50, %v30, 0.0
    %v52 = vsel %vm32, %v51, 0.0
    %53 = vadd.xlane.f32.xlu0 %v52
    %v54 = vpop.xlane.xlu0 %53
    %v55 = vsub.f32 %v44, %v54
    %s56 = smul.u32 0, 8
    %v57 = vlaneseq
    %v58 = vshrl.u32 %v57, 7
    %v59 = vstv %s56
    %v60 = vadd.s32 %v59, %v58
    %vm61 = vcmp.lt.s32.totalorder %v60, 8
    %v62 = vsel %vm61, %v55, 0.0
    %v63 = vrot.slane %v62, 4
    %v64 = vadd.f32 %v62, %v63
    %v65 = vrot.slane %v64, 2
    %v66 = vadd.f32 %v64, %v65
    %v67 = vrot.slane %v66, 1
    %v68 = vadd.f32 %v66, %v67
    %69 = vst [vmem:[#allocation5] sm:$0x1] %v68
    %v70 = vld [vmem:[%s2] sm:$0xff]
    %v71 = vld [vmem:[%s2 + $0x8] sm:$0xff]
    %vm72 = vcmask 64512
    %v74 = vsel %vm72, %v70, 0
    %76 = vmatprep.subr.mxu0 0.0
    %77 = vmatpush1.xpose.msra.mxu0 %v74
    %78 = vmatprep.subr.mxu0 0.0
    %79 = vmatpush1.xpose.msra.mxu0 0.0
    %80 = vmatprep.subr.mxu0 0.0
    %81 = vmatpush1.xpose.msra.mxu0 0.0
    %82 = vmatprep.subr.mxu0 0.0
    %83 = vmatpush1.xpose.msra.mxu0 0.0
    %84 = vmatprep.subr.mxu0 0.0
    %85 = vmatpush1.xpose.msra.mxu0 0.0
    %86 = vmatprep.subr.mxu0 0.0
    %87 = vmatpush1.xpose.msra.mxu0 0.0
    %88 = vmatprep.subr.mxu0 0.0
    %89 = vmatpush1.xpose.msra.mxu0 0.0
    %90 = vmatprep.subr.mxu0 0.0
    %91 = vmatpush1.xpose.msra.mxu0 0.0
    %92 = vmatprep.subr.mxu0 0.0
    %93 = vmatpush1.xpose.msra.mxu0 0.0
    %94 = vmatprep.subr.mxu0 0.0
    %95 = vmatpush1.xpose.msra.mxu0 0.0
    %96 = vmatprep.subr.mxu0 0.0
    %97 = vmatpush1.xpose.msra.mxu0 0.0
    %98 = vmatprep.subr.mxu0 0.0
    %99 = vmatpush1.xpose.msra.mxu0 0.0
    %100 = vmatprep.subr.mxu0 0.0
    %101 = vmatpush1.xpose.msra.mxu0 0.0
    %102 = vmatprep.subr.mxu0 0.0
    %103 = vmatpush1.xpose.msra.mxu0 0.0
    %104 = vmatprep.subr.mxu0 0.0
    %105 = vmatpush1.xpose.msra.mxu0 0.0
    %106 = vmatprep.subr.mxu0 0.0
    %107 = vmatpush1.xpose.msra.mxu0 0.0
    %108 = vmatprep.subr.mxu0 0.0
    %109 = vmatpush1.xpose.msra.mxu0 0.0
    %110 = vmatprep.subr.mxu0 0.0
    %111 = vmatpush1.xpose.msra.mxu0 0.0
    %112 = vmatprep.subr.mxu0 0.0
    %113 = vmatpush1.xpose.msra.mxu0 0.0
    %114 = vmatprep.subr.mxu0 0.0
    %115 = vmatpush1.xpose.msra.mxu0 0.0
    %116 = vmatprep.subr.mxu0 0.0
    %117 = vmatpush1.xpose.msra.mxu0 0.0
    %118 = vmatprep.subr.mxu0 0.0
    %119 = vmatpush1.xpose.msra.mxu0 0.0
    %120 = vmatprep.subr.mxu0 0.0
    %121 = vmatpush1.xpose.msra.mxu0 0.0
    %122 = vmatprep.subr.mxu0 0.0
    %123 = vmatpush1.xpose.msra.mxu0 0.0
    %124 = vmatprep.subr.mxu0 0.0
    %125 = vmatpush1.xpose.msra.mxu0 0.0
    %126 = vmatprep.subr.mxu0 0.0
    %127 = vmatpush1.xpose.msra.mxu0 0.0
    %128 = vmatprep.subr.mxu0 0.0
    %129 = vmatpush1.xpose.msra.mxu0 0.0
    %130 = vmatprep.subr.mxu0 0.0
    %131 = vmatpush1.xpose.msra.mxu0 0.0
    %132 = vmatprep.subr.mxu0 0.0
    %133 = vmatpush1.xpose.msra.mxu0 0.0
    %134 = vmatprep.subr.mxu0 0.0
    %135 = vmatpush1.xpose.msra.mxu0 0.0
    %136 = vmatprep.subr.mxu0 0.0
    %137 = vmatpush1.xpose.msra.mxu0 0.0
    %138 = vmatprep.subr.mxu0 0.0
    %139 = vmatpush1.xpose.msra.mxu0 0.0
    %140 = vmatprep.mubr.f32.mxu0 0.0
    %141 = vmatmul.mubr.f32.gmra.mrb[0].mxu0 %v74
    %v142 = vpop.f32.mrb[0].mxu0
    %v143 = vadd.f32 0.0, %v142
    %v144 = vpop.f32.mrb[0].mxu0
    %145 = vdwg.mxu0
    %v147 = vsel %vm72, %v71, 0
    %149 = vmatprep.subr.mxu0 0.0
    %150 = vmatpush1.xpose.msra.mxu0 %v147
    %151 = vmatprep.subr.mxu0 0.0
    %152 = vmatpush1.xpose.msra.mxu0 0.0
    %153 = vmatprep.subr.mxu0 0.0
    %154 = vmatpush1.xpose.msra.mxu0 0.0
    %155 = vmatprep.subr.mxu0 0.0
    %156 = vmatpush1.xpose.msra.mxu0 0.0
    %157 = vmatprep.subr.mxu0 0.0
    %158 = vmatpush1.xpose.msra.mxu0 0.0
    %159 = vmatprep.subr.mxu0 0.0
    %160 = vmatpush1.xpose.msra.mxu0 0.0
    %161 = vmatprep.subr.mxu0 0.0
    %162 = vmatpush1.xpose.msra.mxu0 0.0
    %163 = vmatprep.subr.mxu0 0.0
    %164 = vmatpush1.xpose.msra.mxu0 0.0
    %165 = vmatprep.subr.mxu0 0.0
    %166 = vmatpush1.xpose.msra.mxu0 0.0
    %167 = vmatprep.subr.mxu0 0.0
    %168 = vmatpush1.xpose.msra.mxu0 0.0
    %169 = vmatprep.subr.mxu0 0.0
    %170 = vmatpush1.xpose.msra.mxu0 0.0
    %171 = vmatprep.subr.mxu0 0.0
    %172 = vmatpush1.xpose.msra.mxu0 0.0
    %173 = vmatprep.subr.mxu0 0.0
    %174 = vmatpush1.xpose.msra.mxu0 0.0
    %175 = vmatprep.subr.mxu0 0.0
    %176 = vmatpush1.xpose.msra.mxu0 0.0
    %177 = vmatprep.subr.mxu0 0.0
    %178 = vmatpush1.xpose.msra.mxu0 0.0
    %179 = vmatprep.subr.mxu0 0.0
    %180 = vmatpush1.xpose.msra.mxu0 0.0
    %181 = vmatprep.subr.mxu0 0.0
    %182 = vmatpush1.xpose.msra.mxu0 0.0
    %183 = vmatprep.subr.mxu0 0.0
    %184 = vmatpush1.xpose.msra.mxu0 0.0
    %185 = vmatprep.subr.mxu0 0.0
    %186 = vmatpush1.xpose.msra.mxu0 0.0
    %187 = vmatprep.subr.mxu0 0.0
    %188 = vmatpush1.xpose.msra.mxu0 0.0
    %189 = vmatprep.subr.mxu0 0.0
    %190 = vmatpush1.xpose.msra.mxu0 0.0
    %191 = vmatprep.subr.mxu0 0.0
    %192 = vmatpush1.xpose.msra.mxu0 0.0
    %193 = vmatprep.subr.mxu0 0.0
    %194 = vmatpush1.xpose.msra.mxu0 0.0
    %195 = vmatprep.subr.mxu0 0.0
    %196 = vmatpush1.xpose.msra.mxu0 0.0
    %197 = vmatprep.subr.mxu0 0.0
    %198 = vmatpush1.xpose.msra.mxu0 0.0
    %199 = vmatprep.subr.mxu0 0.0
    %200 = vmatpush1.xpose.msra.mxu0 0.0
    %201 = vmatprep.subr.mxu0 0.0
    %202 = vmatpush1.xpose.msra.mxu0 0.0
    %203 = vmatprep.subr.mxu0 0.0
    %204 = vmatpush1.xpose.msra.mxu0 0.0
    %205 = vmatprep.subr.mxu0 0.0
    %206 = vmatpush1.xpose.msra.mxu0 0.0
    %207 = vmatprep.subr.mxu0 0.0
    %208 = vmatpush1.xpose.msra.mxu0 0.0
    %209 = vmatprep.subr.mxu0 0.0
    %210 = vmatpush1.xpose.msra.mxu0 0.0
    %211 = vmatprep.subr.mxu0 0.0
    %212 = vmatpush1.xpose.msra.mxu0 0.0
    %213 = vmatprep.mubr.f32.mxu0 0.0
    %214 = vmatmul.mubr.f32.gmra.mrb[0].mxu0 %v147
    %v215 = vpop.f32.mrb[0].mxu0
    %v216 = vadd.f32 0.0, %v215
    %v217 = vpop.f32.mrb[0].mxu0
    %218 = vdwg.mxu0
    %vm219 = vcmp.eq.s32.totalorder %v58, %v46
    %v220 = vsel %vm219, 1, 0
    %v221 = vcvt.s32.f32 %v220
    %v222 = vsub.f32 %v143, %v221
    %v223 = vsub.f32 %v216, %v221
    %v224 = vmul.f32 %v222, %v222
    %v225 = vmul.f32 %v223, %v223
    %v226 = vsel %vm72, %v224, 0.0
    %227 = vadd.xlane.f32.xlu0 %v226
    %v228 = vpop.xlane.xlu0 %227
    %v229 = vsel %vm72, %v225, 0.0
    %230 = vadd.xlane.f32.xlu0 %v229
    %v231 = vpop.xlane.xlu0 %230
    %v234 = vlaneseq
    %v235 = vshrl.u32 %v234, 7
    %v236 = vsub.s32 %v46, %v235
    %v237 = vrot.slane %v228, %v236
    %v238 = vlaneseq
    %v239 = vshrl.u32 %v238, 7
    %v240 = vsub.s32 %v46, %v239
    %v241 = vrot.slane %v231, %v240
    %vm242 = vcmask 1041409
    %v243 = vsel %vm242, %v241, %v237
    %vm245 = vcmask 58368
    %v246 = vsel %vm245, %v243, 0.0
    %247 = vadd.xlane.f32.xlu0 %v246
    %v248 = vpop.xlane.xlu0 %247
    %v249 = vrsqrt.pop %v248
    %v250 = vmul.f32 %v248, %v249
    %vm251 = vcmp.eq.f32.partialorder %v248, inf
    %v252 = vsel %vm251, %v248, %v250
    %vm253 = vcmp.eq.f32.partialorder %v248, 0.0
    %v254 = vand.u32 %v248, 2147483648
    %v255 = vsel %vm253, %v254, %v252
    %vm256 = vcmask 1041408
    %v257 = vsel %vm256, %v255, 0.0
    %v258 = vrot.slane %v257, 4
    %v259 = vadd.f32 %v257, %v258
    %v260 = vrot.slane %v259, 2
    %v261 = vadd.f32 %v259, %v260
    %v262 = vrot.slane %v261, 1
    %v263 = vadd.f32 %v261, %v262
    %v264 = vrcp.pop 2.0
    %v265 = vmul.f32 %v263, %v264
    %266 = vst [vmem:[#allocation6] sm:$0x1] %v265
    // Predicated region
    $region18: #{tpu_custom_call.1} parent=1 // pred_check
      _
    $region19: #{tpu_custom_call.1} parent=1 // pred_check_branch
      %268 = sbr.rel (0) target = $region21
    $region20: #{tpu_custom_call.1} parent=1 // pred_region
      %s270 = ssub.s32 16, 16
      %271 = vsyncadd [#allocation4], %s270
      %s273 = sshll.u32 [#allocation5], 4
      %s274 = int_to_ptr.vmem [resolvable:$true] %s273
      %276 = dma.vmem_to_hbm [thread:$0]  %s274, 16, %s3, [#allocation4]
    $region21: #{tpu_custom_call.1} parent=1 // pred_fallthru
      _
    // Predicated region
    $region22: #{tpu_custom_call.1} parent=1 // pred_check
      _
    $region23: #{tpu_custom_call.1} parent=1 // pred_check_branch
      %278 = sbr.rel (0) target = $region25
    $region24: #{tpu_custom_call.1} parent=1 // pred_region
      %s280 = ssub.s32 16, 16
      %281 = vsyncadd [#allocation7], %s280
      %s283 = sshll.u32 [#allocation6], 4
      %s284 = int_to_ptr.vmem [resolvable:$true] %s283
      %286 = dma.vmem_to_hbm [thread:$0]  %s284, 16, %s4, [#allocation7]
    $region25: #{tpu_custom_call.1} parent=1 // pred_fallthru
      _
    // Predicated region
    $region26: #{tpu_custom_call.1} parent=1 // pred_check
      _
    $region27: #{tpu_custom_call.1} parent=1 // pred_check_branch
      %288 = sbr.rel (0) target = $region29
    $region28: #{tpu_custom_call.1} parent=1 // pred_region
      %289 = dma.done [#allocation4], 16
    $region29: #{tpu_custom_call.1} parent=1 // pred_fallthru
      _
    // Predicated region
    $region30: #{tpu_custom_call.1} parent=1 // pred_check
      _
    $region31: #{tpu_custom_call.1} parent=1 // pred_check_branch
      %291 = sbr.rel (0) target = $region33
    $region32: #{tpu_custom_call.1} parent=1 // pred_region
      %292 = dma.done [#allocation7], 16
    $region33: #{tpu_custom_call.1} parent=1 // pred_fallthru
      _
    %293 = vsyncpa [#allocation3], 1
    %294 = vsyncpa [#allocation4], 1
    %295 = vsyncpa [#allocation7], 1

</llo_original>
